<compile_context>
chip_gen: v5e
topology: v5e:2x2
jax: 0.10.0
libtpu: 0.0.40
codegen_flags: <defaults>
</compile_context>

<pallas_src>
import jax
import jax.numpy as jnp
from jax.experimental import pallas as pl
from jax.experimental.pallas import tpu as pltpu

LANE = 128


def _round_up(x, m):
    return ((x + m - 1) // m) * m


def _tile_cap(in_feat, hidden, c_pad, inter_bytes, budget=24 * 1024 * 1024):
    """Largest batch-tile (rows) whose VMEM footprint fits the budget.

    Footprint per row: double-buffered f32 x stream + in-kernel bf16 copy fed to the
    MXU + double-buffered logits / intermediate writebacks + f32 activation temp.
    Weights (<1 MiB here) live in the remaining headroom under the 32 MiB limit.
    """
    per_row = (2 * in_feat * 4            # streamed f32 x, 2 pipeline buffers
               + in_feat * 2              # in-kernel bf16 copy of the x tile
               + 2 * c_pad * 4            # logits f32, 2 buffers
               + 2 * hidden * inter_bytes  # intermediate, 2 buffers
               + hidden * 4)              # f32 activation temporary
    return max(16, min(2048, (budget // per_row) // 16 * 16))


def _largest_divisor_tile(n_pad, cap):
    """Largest 16-multiple tile <= cap dividing n_pad, leaving >=2 grid steps
    (so both v7x TensorCores stay busy under dimension_semantics=('parallel',))."""
    cap = min(cap, n_pad // 2)            # at least 2 grid steps
    cap = max(16, (cap // 16) * 16)
    for t in range(cap, 15, -16):
        if n_pad % t == 0:
            return t
    return 16


def _split_nn_kernel(x_ref, wa_ref, ba_ref, wb_ref, bb_ref, logits_ref, inter_ref):
    # modelA[i]: Linear + ReLU (client half).
    # x arrives as f32 (one HBM pass); cast to bf16 in VMEM right before the MXU.
    x_bf = x_ref[...].astype(jnp.bfloat16)
    h = jnp.dot(x_bf, wa_ref[...], preferred_element_type=jnp.float32)
    h = jnp.maximum(h + ba_ref[...], 0.0)          # bias broadcast over rows, ReLU
    inter_ref[...] = h.astype(inter_ref.dtype)     # "intermediate" (bf16 by default)

    # modelB[0]: Linear (server head), classifier columns lane-padded to 128.
    logits = jnp.dot(h.astype(wb_ref.dtype), wb_ref[...],
                     preferred_element_type=jnp.float32)
    logits_ref[...] = logits + bb_ref[...]


def single_split_nn_forward(x_nchw, wa, ba, wb, bb, *, tm=None,
                            intermediate_dtype=jnp.bfloat16):
    """Pallas forward of SingleSplitNN.forward(x, i) -> (logits, intermediate).

    NOTE: mixed precision — x/wa/wb are consumed as bf16 with f32 MXU accumulation;
    the returned intermediate is `intermediate_dtype` (bf16 by default).
    """
    n = x_nchw.shape[0]
    in_feat = wa.shape[0]
    hidden = wa.shape[1]
    num_classes = wb.shape[1]
    c_pad = _round_up(num_classes, LANE)           # lane-dense logits slab width

    # glue: NCHW -> (N, C*H*W), row-major == torch.view(N, -1). Kept in f32; the
    # bf16 cast happens inside the kernel so x only makes one HBM pass.
    x2d = x_nchw.reshape(n, in_feat).astype(jnp.float32)
    wa_bf = wa.astype(jnp.bfloat16)
    # zero-pad classifier columns so padded lanes of the logits output are exactly 0.
    wb_bf = jnp.zeros((hidden, c_pad), jnp.bfloat16).at[:, :num_classes].set(
        wb.astype(jnp.bfloat16))
    ba2 = ba.reshape(1, hidden).astype(jnp.float32)
    bb2 = jnp.zeros((1, c_pad), jnp.float32).at[:, :num_classes].set(
        bb.astype(jnp.float32))

    inter_bytes = jnp.dtype(intermediate_dtype).itemsize

    # --- batch tiling --------------------------------------------------------
    if n <= 16:
        # tiny batch: one tile equal to the full batch dim (allowed by the (8,128)
        # rule) — no padding, no extra passes.
        tm = n
        n_pad = n
    else:
        n_pad = _round_up(n, 16)          # bf16 packs 2 rows/sublane -> 16-row align
        if tm is None:
            tm = _largest_divisor_tile(n_pad, _tile_cap(in_feat, hidden, c_pad,
                                                        inter_bytes))
        else:
            tm = max(16, (tm // 16) * 16)
            n_pad = _round_up(n_pad, tm)
    if n_pad != n:
        # only for ragged batches (n % 16 != 0 or user-forced tm); one extra x pass.
        x2d = jnp.pad(x2d, ((0, n_pad - n), (0, 0)))
    grid = (n_pad // tm,)

    cost = pl.CostEstimate(
        flops=2 * n_pad * in_feat * hidden + 2 * n_pad * hidden * c_pad,
        transcendentals=0,
        bytes_accessed=(n_pad * in_feat * 4 + wa_bf.size * 2 + wb_bf.size * 2
                        + ba2.size * 4 + bb2.size * 4
                        + n_pad * c_pad * 4 + n_pad * hidden * inter_bytes),
    )

    logits_pad, inter_pad = pl.pallas_call(
        _split_nn_kernel,
        grid=grid,
        in_specs=[
            pl.BlockSpec((tm, in_feat), lambda i: (i, 0)),      # x: streamed per tile
            pl.BlockSpec((in_feat, hidden), lambda i: (0, 0)),  # wa: VMEM-resident
            pl.BlockSpec((1, hidden), lambda i: (0, 0)),        # ba
            pl.BlockSpec((hidden, c_pad), lambda i: (0, 0)),    # wb (lane-padded)
            pl.BlockSpec((1, c_pad), lambda i: (0, 0)),         # bb (lane-padded)
        ],
        out_specs=[
            pl.BlockSpec((tm, c_pad), lambda i: (i, 0)),        # lane-dense logits
            pl.BlockSpec((tm, hidden), lambda i: (i, 0)),       # intermediate
        ],
        out_shape=[
            jax.ShapeDtypeStruct((n_pad, c_pad), jnp.float32),
            jax.ShapeDtypeStruct((n_pad, hidden), intermediate_dtype),
        ],
        compiler_params=pltpu.CompilerParams(
            dimension_semantics=("parallel",),   # megacore sharding on v7x
            vmem_limit_bytes=32 * 1024 * 1024,   # explicit (v5e default is 16 MiB)
        ),
        cost_estimate=cost,
    )(x2d, wa_bf, ba2, wb_bf, bb2)

    logits = logits_pad[:n, :num_classes]
    intermediate = inter_pad if n_pad == n else inter_pad[:n]
    return logits, intermediate


def _init_params(key, in_feat, hidden, num_classes):
    k1, k2, k3, k4 = jax.random.split(key, 4)
    lim_a = 1.0 / jnp.sqrt(in_feat)
    lim_b = 1.0 / jnp.sqrt(hidden)
    wa = jax.random.uniform(k1, (in_feat, hidden), jnp.float32, -lim_a, lim_a)
    ba = jax.random.uniform(k2, (hidden,), jnp.float32, -lim_a, lim_a)
    wb = jax.random.uniform(k3, (hidden, num_classes), jnp.float32, -lim_b, lim_b)
    bb = jax.random.uniform(k4, (num_classes,), jnp.float32, -lim_b, lim_b)
    return wa, ba, wb, bb


if __name__ == "__main__":
    # small shapes consistent with the module's conv-style NCHW input
    N, C, H, W = 2, 4, 16, 16
    IN_FEAT = C * H * W          # 1024
    HIDDEN = 128
    NUM_CLASSES = 10

    key = jax.random.PRNGKey(0)
    kx, kp = jax.random.split(key)
    x = jax.random.normal(kx, (N, C, H, W), jnp.float32)
    wa, ba, wb, bb = _init_params(kp, IN_FEAT, HIDDEN, NUM_CLASSES)

    logits, intermediate = single_split_nn_forward(x, wa, ba, wb, bb)
    jax.block_until_ready((logits, intermediate))

    # reference check in plain JAX using the same mixed-precision math
    x2d_bf = x.reshape(N, IN_FEAT).astype(jnp.bfloat16)
    h_ref = jnp.maximum(
        jnp.dot(x2d_bf, wa.astype(jnp.bfloat16),
                preferred_element_type=jnp.float32) + ba, 0.0)
    inter_ref = h_ref.astype(jnp.bfloat16)
    logits_ref = jnp.dot(inter_ref, wb.astype(jnp.bfloat16),
                         preferred_element_type=jnp.float32) + bb

    assert intermediate.shape == (N, HIDDEN)
    assert intermediate.dtype == jnp.bfloat16
    assert logits.shape == (N, NUM_CLASSES)
    assert logits.dtype == jnp.float32
    assert jnp.allclose(intermediate.astype(jnp.float32),
                        inter_ref.astype(jnp.float32), atol=1e-2, rtol=1e-2)
    assert jnp.allclose(logits, logits_ref, atol=1e-2, rtol=1e-2)

    print("KERNEL_OK")
</pallas_src>

<mosaic_0001>
module attributes {stable_mosaic.version = 11 : i64} {
  func.func @_split_nn_kernel(%arg0: i32, %arg1: memref<2x1024xf32, #tpu.memory_space<vmem>>, %arg2: memref<1024x128xbf16, #tpu.memory_space<vmem>>, %arg3: memref<1x128xf32, #tpu.memory_space<vmem>>, %arg4: memref<128x128xbf16, #tpu.memory_space<vmem>>, %arg5: memref<1x128xf32, #tpu.memory_space<vmem>>, %arg6: memref<2x128xf32, #tpu.memory_space<vmem>>, %arg7: memref<2x128xbf16, #tpu.memory_space<vmem>>) attributes {dimension_semantics = [#tpu.dimension_semantics<parallel>], iteration_bounds = array<i64: 1>, scalar_prefetch = 0 : i64, scratch_operands = 0 : i64, tpu.core_type = #tpu.core_type<tc>, window_params = [{transform_indices = @transform_0, window_bounds = array<i64: 2, 1024>}, {pipeline_mode = #tpu.pipeline_mode<synchronous>, transform_indices = @transform_1, window_bounds = array<i64: 1024, 128>}, {pipeline_mode = #tpu.pipeline_mode<synchronous>, transform_indices = @transform_2, window_bounds = array<i64: 1, 128>}, {pipeline_mode = #tpu.pipeline_mode<synchronous>, transform_indices = @transform_3, window_bounds = array<i64: 128, 128>}, {pipeline_mode = #tpu.pipeline_mode<synchronous>, transform_indices = @transform_4, window_bounds = array<i64: 1, 128>}, {transform_indices = @transform_5, window_bounds = array<i64: 2, 128>}, {transform_indices = @transform_6, window_bounds = array<i64: 2, 128>}]} {
    %c0 = arith.constant 0 : index
    %c0_0 = arith.constant 0 : index
    %0 = vector.load %arg1[%c0, %c0_0] : memref<2x1024xf32, #tpu.memory_space<vmem>>, vector<2x1024xf32>
    %1 = arith.truncf %0 : vector<2x1024xf32> to vector<2x1024xbf16>
    %c0_1 = arith.constant 0 : index
    %c0_2 = arith.constant 0 : index
    %2 = vector.load %arg2[%c0_1, %c0_2] : memref<1024x128xbf16, #tpu.memory_space<vmem>>, vector<1024x128xbf16>
    %cst = arith.constant dense<0.000000e+00> : vector<2x128xf32>
    %3 = tpu.matmul %1, %2, %cst {dimension_numbers = #tpu.dot_dimension_numbers<[1], [0], [0], [1], [0, 0, 1, 1], [], []>} : vector<2x1024xbf16>, vector<1024x128xbf16>, vector<2x128xf32> -> vector<2x128xf32>
    %c0_3 = arith.constant 0 : index
    %c0_4 = arith.constant 0 : index
    %4 = vector.load %arg3[%c0_3, %c0_4] : memref<1x128xf32, #tpu.memory_space<vmem>>, vector<1x128xf32>
    %5 = vector.broadcast %4 : vector<1x128xf32> to vector<2x128xf32>
    %6 = arith.addf %3, %5 : vector<2x128xf32>
    %cst_5 = arith.constant 0.000000e+00 : f32
    %7 = vector.broadcast %cst_5 : f32 to vector<2x128xf32>
    %8 = arith.maximumf %6, %7 : vector<2x128xf32>
    %9 = arith.truncf %8 : vector<2x128xf32> to vector<2x128xbf16>
    %c0_6 = arith.constant 0 : index
    %c0_7 = arith.constant 0 : index
    %10 = vector.load %arg7[%c0_6, %c0_7] : memref<2x128xbf16, #tpu.memory_space<vmem>>, vector<2x128xbf16>
    tpu.vector_store %arg7[%c0_6, %c0_7], %9 {strides = array<i32>} : memref<2x128xbf16, #tpu.memory_space<vmem>>, vector<2x128xbf16>,
    %11 = arith.truncf %8 : vector<2x128xf32> to vector<2x128xbf16>
    %c0_8 = arith.constant 0 : index
    %c0_9 = arith.constant 0 : index
    %12 = vector.load %arg4[%c0_8, %c0_9] : memref<128x128xbf16, #tpu.memory_space<vmem>>, vector<128x128xbf16>
    %cst_10 = arith.constant dense<0.000000e+00> : vector<2x128xf32>
    %13 = tpu.matmul %11, %12, %cst_10 {dimension_numbers = #tpu.dot_dimension_numbers<[1], [0], [0], [1], [0, 0, 1, 1], [], []>} : vector<2x128xbf16>, vector<128x128xbf16>, vector<2x128xf32> -> vector<2x128xf32>
    %c0_11 = arith.constant 0 : index
    %c0_12 = arith.constant 0 : index
    %14 = vector.load %arg5[%c0_11, %c0_12] : memref<1x128xf32, #tpu.memory_space<vmem>>, vector<1x128xf32>
    %15 = vector.broadcast %14 : vector<1x128xf32> to vector<2x128xf32>
    %16 = arith.addf %13, %15 : vector<2x128xf32>
    %c0_13 = arith.constant 0 : index
    %c0_14 = arith.constant 0 : index
    %17 = vector.load %arg6[%c0_13, %c0_14] : memref<2x128xf32, #tpu.memory_space<vmem>>, vector<2x128xf32>
    tpu.vector_store %arg6[%c0_13, %c0_14], %16 {strides = array<i32>} : memref<2x128xf32, #tpu.memory_space<vmem>>, vector<2x128xf32>,
    return
  }
  func.func @transform_0(%arg0: i32) -> (i32, i32) {
    %c0_i32 = arith.constant 0 : i32
    %c0_i32_0 = arith.constant 0 : i32
    return %arg0, %c0_i32 : i32, i32
  }
  func.func @transform_1(%arg0: i32) -> (i32, i32) {
    %c0_i32 = arith.constant 0 : i32
    %c0_i32_0 = arith.constant 0 : i32
    %c0_i32_1 = arith.constant 0 : i32
    return %c0_i32, %c0_i32_0 : i32, i32
  }
  func.func @transform_2(%arg0: i32) -> (i32, i32) {
    %c0_i32 = arith.constant 0 : i32
    %c0_i32_0 = arith.constant 0 : i32
    %c0_i32_1 = arith.constant 0 : i32
    return %c0_i32, %c0_i32_0 : i32, i32
  }
  func.func @transform_3(%arg0: i32) -> (i32, i32) {
    %c0_i32 = arith.constant 0 : i32
    %c0_i32_0 = arith.constant 0 : i32
    %c0_i32_1 = arith.constant 0 : i32
    return %c0_i32, %c0_i32_0 : i32, i32
  }
  func.func @transform_4(%arg0: i32) -> (i32, i32) {
    %c0_i32 = arith.constant 0 : i32
    %c0_i32_0 = arith.constant 0 : i32
    %c0_i32_1 = arith.constant 0 : i32
    return %c0_i32, %c0_i32_0 : i32, i32
  }
  func.func @transform_5(%arg0: i32) -> (i32, i32) {
    %c0_i32 = arith.constant 0 : i32
    %c0_i32_0 = arith.constant 0 : i32
    return %arg0, %c0_i32 : i32, i32
  }
  func.func @transform_6(%arg0: i32) -> (i32, i32) {
    %c0_i32 = arith.constant 0 : i32
    %c0_i32_0 = arith.constant 0 : i32
    return %arg0, %c0_i32 : i32, i32
  }
}

</mosaic_0001>

<llo_original>
// kernel: tpu_custom_call.1
$region0: #{tpu_custom_call.1}
  #allocation0 [shape = 'u32[]', space=smem, size = 0x4, offset = 0x4, fixed_abs, tag = 'smem constant byte address 0x4 - core index']
  #allocation1 [shape = 'u32[72,128]{1,0:T(1,128)}', space=vmem, size = 0x9000, scoped, tag = 'internal scratch']
  %s0 = inlined_call_operand.hbm [shape: f32[2,1024], index: 0, kind: input, shape index: {}]
  %s1 = inlined_call_operand.hbm [shape: bf16[1024,128], index: 1, kind: input, shape index: {}]
  %s2 = inlined_call_operand.vmem [shape: f32[1,128], index: 2, kind: input, shape index: {}]
  %s3 = inlined_call_operand.hbm [shape: bf16[128,128], index: 3, kind: input, shape index: {}]
  %s4 = inlined_call_operand.vmem [shape: f32[1,128], index: 4, kind: input, shape index: {}]
  %s5 = inlined_call_operand.hbm [shape: f32[2,128], index: 5, kind: output, shape index: {0}]
  %s6 = inlined_call_operand.hbm [shape: bf16[2,128], index: 6, kind: output, shape index: {1}]
  %7 = xla_tuple %s5, %s6
  %s8 = sld [smem:[#allocation0]]
  $region50: #{tpu_custom_call.1} parent=0
    _
  %s10 = ssub.s32 1, %s8
  %s11 = scalar_select 0, %s10, %s8
  $region1: #{tpu_custom_call.1} parent=0
    #allocation2 [shape = 'u8[8192]{0}', space=vmem, size = 0x2000, scoped, tag = 'input window, operand 0, single buffered']
    #allocation3 [shape = 's32[1]{0}', space=sflag, size = 0x4, scoped, tag = 'scoped memory for tpu_custom_call.1']
    #allocation4 [shape = 's32[1]{0}', space=sflag, size = 0x4, scoped, tag = 'scoped memory for tpu_custom_call.1']
    #allocation5 [shape = 'u8[262144]{0}', space=vmem, size = 0x40000, scoped, tag = 'input window, operand 1, single buffered']
    #allocation6 [shape = 's32[1]{0}', space=sflag, size = 0x4, scoped, tag = 'scoped memory for tpu_custom_call.1']
    #allocation7 [shape = 'u8[32768]{0}', space=vmem, size = 0x8000, scoped, tag = 'input window, operand 3, single buffered']
    #allocation8 [shape = 'u8[1024]{0}', space=vmem, size = 0x400, scoped, tag = 'output window, operand 0, single buffered']
    #allocation9 [shape = 'u8[512]{0}', space=vmem, size = 0x400, scoped, tag = 'output window, operand 1, single buffered']
    #allocation10 [shape = 's32[1]{0}', space=sflag, size = 0x4, scoped, tag = 'scoped memory for tpu_custom_call.1']
    %12 = vsyncpa [#allocation3], 0
    %13 = vsyncpa [#allocation6], 0
    %14 = vsyncpa [#allocation4], 0
    %15 = vsyncpa [#allocation10], 0
    // Predicated region
    $region2: #{tpu_custom_call.1} parent=1 // pred_check
      _
    $region3: #{tpu_custom_call.1} parent=1 // pred_check_branch
      %17 = sbr.rel (0) target = $region5
    $region4: #{tpu_custom_call.1} parent=1 // pred_region
      %19 = vsyncadd [#allocation3], 0
      %s21 = sshll.u32 %s0, 4
      %s22 = int_to_ptr.hbm [resolvable:$true] %s21
      %s23 = sshll.u32 [#allocation2], 4
      %s24 = int_to_ptr.vmem [resolvable:$true] %s23
      %26 = dma.hbm_to_vmem [thread:$0]  %s22, 256, %s24, [#allocation3]
    $region5: #{tpu_custom_call.1} parent=1 // pred_fallthru
      _
    // Predicated region
    $region6: #{tpu_custom_call.1} parent=1 // pred_check
      _
    $region7: #{tpu_custom_call.1} parent=1 // pred_check_branch
      %28 = sbr.rel (0) target = $region9
    $region8: #{tpu_custom_call.1} parent=1 // pred_region
      %30 = vsyncadd [#allocation6], 0
      %s31 = sshll.u32 %s1, 4
      %s32 = int_to_ptr.hbm [resolvable:$true] %s31
      %s33 = sshll.u32 [#allocation5], 4
      %s34 = int_to_ptr.vmem [resolvable:$true] %s33
      %39 = dma.hbm_to_vmem [thread:$0]  %s32, 8192, %s34, [#allocation6], 64, 64, 4
    $region9: #{tpu_custom_call.1} parent=1 // pred_fallthru
      _
    // Predicated region
    $region10: #{tpu_custom_call.1} parent=1 // pred_check
      _
    $region11: #{tpu_custom_call.1} parent=1 // pred_check_branch
      %41 = sbr.rel (0) target = $region13
    $region12: #{tpu_custom_call.1} parent=1 // pred_region
      _
    $region13: #{tpu_custom_call.1} parent=1 // pred_fallthru
      _
    // Predicated region
    $region14: #{tpu_custom_call.1} parent=1 // pred_check
      _
    $region15: #{tpu_custom_call.1} parent=1 // pred_check_branch
      %43 = sbr.rel (0) target = $region17
    $region16: #{tpu_custom_call.1} parent=1 // pred_region
      %45 = vsyncadd [#allocation6], 0
      %s46 = sshll.u32 %s3, 4
      %s47 = int_to_ptr.hbm [resolvable:$true] %s46
      %s48 = sshll.u32 [#allocation7], 4
      %s49 = int_to_ptr.vmem [resolvable:$true] %s48
      %54 = dma.hbm_to_vmem [thread:$0]  %s47, 1024, %s49, [#allocation6], 64, 64, 4
    $region17: #{tpu_custom_call.1} parent=1 // pred_fallthru
      _
    // Predicated region
    $region18: #{tpu_custom_call.1} parent=1 // pred_check
      _
    $region19: #{tpu_custom_call.1} parent=1 // pred_check_branch
      %56 = sbr.rel (0) target = $region21
    $region20: #{tpu_custom_call.1} parent=1 // pred_region
      _
    $region21: #{tpu_custom_call.1} parent=1 // pred_fallthru
      _
    // Predicated region
    $region22: #{tpu_custom_call.1} parent=1 // pred_check
      _
    $region23: #{tpu_custom_call.1} parent=1 // pred_check_branch
      %58 = sbr.rel (0) target = $region25
    $region24: #{tpu_custom_call.1} parent=1 // pred_region
      %60 = dma.done [#allocation3], 256
    $region25: #{tpu_custom_call.1} parent=1 // pred_fallthru
      _
    // Predicated region
    $region26: #{tpu_custom_call.1} parent=1 // pred_check
      _
    $region27: #{tpu_custom_call.1} parent=1 // pred_check_branch
      %62 = sbr.rel (0) target = $region29
    $region28: #{tpu_custom_call.1} parent=1 // pred_region
      %64 = dma.done [#allocation6], 8192
    $region29: #{tpu_custom_call.1} parent=1 // pred_fallthru
      _
    // Predicated region
    $region30: #{tpu_custom_call.1} parent=1 // pred_check
      _
    $region31: #{tpu_custom_call.1} parent=1 // pred_check_branch
      %66 = sbr.rel (0) target = $region33
    $region32: #{tpu_custom_call.1} parent=1 // pred_region
      %68 = dma.done [#allocation6], 1024
    $region33: #{tpu_custom_call.1} parent=1 // pred_fallthru
      _
    %v69 = vld [vmem:[#allocation2] sm:$0xff]
    %v70 = vld [vmem:[#allocation2 + $0x8] sm:$0xff]
    %73 = vst [vmem:[#allocation1] ss:$4 sm:$0xff] %v69
    %s74 = scalar_lea.vmem [#allocation1], 32
    %75 = vst [vmem:[%s74] ss:$4 sm:$0xff] %v70
    %v76 = vld.sshfl [vmem:[#allocation1] sm:$0xff pattern:$0x73625140]
    %v77 = vld.sshfl [vmem:[#allocation1 + $0x8] sm:$0xff pattern:$0x73625140]
    %v78 = vld.sshfl [vmem:[#allocation1 + $0x10] sm:$0xff pattern:$0x73625140]
    %v79 = vld.sshfl [vmem:[#allocation1 + $0x18] sm:$0xff pattern:$0x73625140]
    %v80 = vld.sshfl [vmem:[#allocation1 + $0x20] sm:$0xff pattern:$0x73625140]
    %v81 = vld.sshfl [vmem:[#allocation1 + $0x28] sm:$0xff pattern:$0x73625140]
    %v82 = vld.sshfl [vmem:[#allocation1 + $0x30] sm:$0xff pattern:$0x73625140]
    %v83 = vld.sshfl [vmem:[#allocation1 + $0x38] sm:$0xff pattern:$0x73625140]
    %v92 = vpack.c.bf16 %v76, %v76
    %v93 = vpack.c.bf16 %v77, %v77
    %v94 = vpack.c.bf16 %v78, %v78
    %v95 = vpack.c.bf16 %v79, %v79
    %v96 = vpack.c.bf16 %v80, %v80
    %v97 = vpack.c.bf16 %v81, %v81
    %v98 = vpack.c.bf16 %v82, %v82
    %v99 = vpack.c.bf16 %v83, %v83
    %v100 = vld [vmem:[#allocation5] sm:$0xf]
    %v101 = vld [vmem:[#allocation5 + $0x4] sm:$0xf]
    %v102 = vld [vmem:[#allocation5 + $0x8] sm:$0xf]
    %v103 = vld [vmem:[#allocation5 + $0xc] sm:$0xf]
    %v104 = vld [vmem:[#allocation5 + $0x10] sm:$0xf]
    %v105 = vld [vmem:[#allocation5 + $0x14] sm:$0xf]
    %v106 = vld [vmem:[#allocation5 + $0x18] sm:$0xf]
    %v107 = vld [vmem:[#allocation5 + $0x1c] sm:$0xf]
    %v108 = vld [vmem:[#allocation5 + $0x20] sm:$0xf]
    %v109 = vld [vmem:[#allocation5 + $0x24] sm:$0xf]
    %v110 = vld [vmem:[#allocation5 + $0x28] sm:$0xf]
    %v111 = vld [vmem:[#allocation5 + $0x2c] sm:$0xf]
    %v112 = vld [vmem:[#allocation5 + $0x30] sm:$0xf]
    %v113 = vld [vmem:[#allocation5 + $0x34] sm:$0xf]
    %v114 = vld [vmem:[#allocation5 + $0x38] sm:$0xf]
    %v115 = vld [vmem:[#allocation5 + $0x3c] sm:$0xf]
    %v116 = vld [vmem:[#allocation5 + $0x40] sm:$0xf]
    %v117 = vld [vmem:[#allocation5 + $0x44] sm:$0xf]
    %v118 = vld [vmem:[#allocation5 + $0x48] sm:$0xf]
    %v119 = vld [vmem:[#allocation5 + $0x4c] sm:$0xf]
    %v120 = vld [vmem:[#allocation5 + $0x50] sm:$0xf]
    %v121 = vld [vmem:[#allocation5 + $0x54] sm:$0xf]
    %v122 = vld [vmem:[#allocation5 + $0x58] sm:$0xf]
    %v123 = vld [vmem:[#allocation5 + $0x5c] sm:$0xf]
    %v124 = vld [vmem:[#allocation5 + $0x60] sm:$0xf]
    %v125 = vld [vmem:[#allocation5 + $0x64] sm:$0xf]
    %v126 = vld [vmem:[#allocation5 + $0x68] sm:$0xf]
    %v127 = vld [vmem:[#allocation5 + $0x6c] sm:$0xf]
    %v128 = vld [vmem:[#allocation5 + $0x70] sm:$0xf]
    %v129 = vld [vmem:[#allocation5 + $0x74] sm:$0xf]
    %v130 = vld [vmem:[#allocation5 + $0x78] sm:$0xf]
    %v131 = vld [vmem:[#allocation5 + $0x7c] sm:$0xf]
    %v132 = vld [vmem:[#allocation5 + $0x80] sm:$0xf]
    %v133 = vld [vmem:[#allocation5 + $0x84] sm:$0xf]
    %v134 = vld [vmem:[#allocation5 + $0x88] sm:$0xf]
    %v135 = vld [vmem:[#allocation5 + $0x8c] sm:$0xf]
    %v136 = vld [vmem:[#allocation5 + $0x90] sm:$0xf]
    %v137 = vld [vmem:[#allocation5 + $0x94] sm:$0xf]
    %v138 = vld [vmem:[#allocation5 + $0x98] sm:$0xf]
    %v139 = vld [vmem:[#allocation5 + $0x9c] sm:$0xf]
    %v140 = vld [vmem:[#allocation5 + $0xa0] sm:$0xf]
    %v141 = vld [vmem:[#allocation5 + $0xa4] sm:$0xf]
    %v142 = vld [vmem:[#allocation5 + $0xa8] sm:$0xf]
    %v143 = vld [vmem:[#allocation5 + $0xac] sm:$0xf]
    %v144 = vld [vmem:[#allocation5 + $0xb0] sm:$0xf]
    %v145 = vld [vmem:[#allocation5 + $0xb4] sm:$0xf]
    %v146 = vld [vmem:[#allocation5 + $0xb8] sm:$0xf]
    %v147 = vld [vmem:[#allocation5 + $0xbc] sm:$0xf]
    %v148 = vld [vmem:[#allocation5 + $0xc0] sm:$0xf]
    %v149 = vld [vmem:[#allocation5 + $0xc4] sm:$0xf]
    %v150 = vld [vmem:[#allocation5 + $0xc8] sm:$0xf]
    %v151 = vld [vmem:[#allocation5 + $0xcc] sm:$0xf]
    %v152 = vld [vmem:[#allocation5 + $0xd0] sm:$0xf]
    %v153 = vld [vmem:[#allocation5 + $0xd4] sm:$0xf]
    %v154 = vld [vmem:[#allocation5 + $0xd8] sm:$0xf]
    %v155 = vld [vmem:[#allocation5 + $0xdc] sm:$0xf]
    %v156 = vld [vmem:[#allocation5 + $0xe0] sm:$0xf]
    %v157 = vld [vmem:[#allocation5 + $0xe4] sm:$0xf]
    %v158 = vld [vmem:[#allocation5 + $0xe8] sm:$0xf]
    %v159 = vld [vmem:[#allocation5 + $0xec] sm:$0xf]
    %v160 = vld [vmem:[#allocation5 + $0xf0] sm:$0xf]
    %v161 = vld [vmem:[#allocation5 + $0xf4] sm:$0xf]
    %v162 = vld [vmem:[#allocation5 + $0xf8] sm:$0xf]
    %v163 = vld [vmem:[#allocation5 + $0xfc] sm:$0xf]
    %v164 = vld [vmem:[#allocation5 + $0x100] sm:$0xf]
    %v165 = vld [vmem:[#allocation5 + $0x104] sm:$0xf]
    %v166 = vld [vmem:[#allocation5 + $0x108] sm:$0xf]
    %v167 = vld [vmem:[#allocation5 + $0x10c] sm:$0xf]
    %v168 = vld [vmem:[#allocation5 + $0x110] sm:$0xf]
    %v169 = vld [vmem:[#allocation5 + $0x114] sm:$0xf]
    %v170 = vld [vmem:[#allocation5 + $0x118] sm:$0xf]
    %v171 = vld [vmem:[#allocation5 + $0x11c] sm:$0xf]
    %v172 = vld [vmem:[#allocation5 + $0x120] sm:$0xf]
    %v173 = vld [vmem:[#allocation5 + $0x124] sm:$0xf]
    %v174 = vld [vmem:[#allocation5 + $0x128] sm:$0xf]
    %v175 = vld [vmem:[#allocation5 + $0x12c] sm:$0xf]
    %v176 = vld [vmem:[#allocation5 + $0x130] sm:$0xf]
    %v177 = vld [vmem:[#allocation5 + $0x134] sm:$0xf]
    %v178 = vld [vmem:[#allocation5 + $0x138] sm:$0xf]
    %v179 = vld [vmem:[#allocation5 + $0x13c] sm:$0xf]
    %v180 = vld [vmem:[#allocation5 + $0x140] sm:$0xf]
    %v181 = vld [vmem:[#allocation5 + $0x144] sm:$0xf]
    %v182 = vld [vmem:[#allocation5 + $0x148] sm:$0xf]
    %v183 = vld [vmem:[#allocation5 + $0x14c] sm:$0xf]
    %v184 = vld [vmem:[#allocation5 + $0x150] sm:$0xf]
    %v185 = vld [vmem:[#allocation5 + $0x154] sm:$0xf]
    %v186 = vld [vmem:[#allocation5 + $0x158] sm:$0xf]
    %v187 = vld [vmem:[#allocation5 + $0x15c] sm:$0xf]
    %v188 = vld [vmem:[#allocation5 + $0x160] sm:$0xf]
    %v189 = vld [vmem:[#allocation5 + $0x164] sm:$0xf]
    %v190 = vld [vmem:[#allocation5 + $0x168] sm:$0xf]
    %v191 = vld [vmem:[#allocation5 + $0x16c] sm:$0xf]
    %v192 = vld [vmem:[#allocation5 + $0x170] sm:$0xf]
    %v193 = vld [vmem:[#allocation5 + $0x174] sm:$0xf]
    %v194 = vld [vmem:[#allocation5 + $0x178] sm:$0xf]
    %v195 = vld [vmem:[#allocation5 + $0x17c] sm:$0xf]
    %v196 = vld [vmem:[#allocation5 + $0x180] sm:$0xf]
    %v197 = vld [vmem:[#allocation5 + $0x184] sm:$0xf]
    %v198 = vld [vmem:[#allocation5 + $0x188] sm:$0xf]
    %v199 = vld [vmem:[#allocation5 + $0x18c] sm:$0xf]
    %v200 = vld [vmem:[#allocation5 + $0x190] sm:$0xf]
    %v201 = vld [vmem:[#allocation5 + $0x194] sm:$0xf]
    %v202 = vld [vmem:[#allocation5 + $0x198] sm:$0xf]
    %v203 = vld [vmem:[#allocation5 + $0x19c] sm:$0xf]
    %v204 = vld [vmem:[#allocation5 + $0x1a0] sm:$0xf]
    %v205 = vld [vmem:[#allocation5 + $0x1a4] sm:$0xf]
    %v206 = vld [vmem:[#allocation5 + $0x1a8] sm:$0xf]
    %v207 = vld [vmem:[#allocation5 + $0x1ac] sm:$0xf]
    %v208 = vld [vmem:[#allocation5 + $0x1b0] sm:$0xf]
    %v209 = vld [vmem:[#allocation5 + $0x1b4] sm:$0xf]
    %v210 = vld [vmem:[#allocation5 + $0x1b8] sm:$0xf]
    %v211 = vld [vmem:[#allocation5 + $0x1bc] sm:$0xf]
    %v212 = vld [vmem:[#allocation5 + $0x1c0] sm:$0xf]
    %v213 = vld [vmem:[#allocation5 + $0x1c4] sm:$0xf]
    %v214 = vld [vmem:[#allocation5 + $0x1c8] sm:$0xf]
    %v215 = vld [vmem:[#allocation5 + $0x1cc] sm:$0xf]
    %v216 = vld [vmem:[#allocation5 + $0x1d0] sm:$0xf]
    %v217 = vld [vmem:[#allocation5 + $0x1d4] sm:$0xf]
    %v218 = vld [vmem:[#allocation5 + $0x1d8] sm:$0xf]
    %v219 = vld [vmem:[#allocation5 + $0x1dc] sm:$0xf]
    %v220 = vld [vmem:[#allocation5 + $0x1e0] sm:$0xf]
    %v221 = vld [vmem:[#allocation5 + $0x1e4] sm:$0xf]
    %v222 = vld [vmem:[#allocation5 + $0x1e8] sm:$0xf]
    %v223 = vld [vmem:[#allocation5 + $0x1ec] sm:$0xf]
    %v224 = vld [vmem:[#allocation5 + $0x1f0] sm:$0xf]
    %v225 = vld [vmem:[#allocation5 + $0x1f4] sm:$0xf]
    %v226 = vld [vmem:[#allocation5 + $0x1f8] sm:$0xf]
    %v227 = vld [vmem:[#allocation5 + $0x1fc] sm:$0xf]
    %v228 = vld [vmem:[%s2] sm:$0x1]
    %v230 = vperm.slane %v228, 0
    %v360 = vunpack.c.l.b16 %v100
    %v361 = vunpack.c.l.b16 %v101
    %v362 = vunpack.c.l.b16 %v102
    %v363 = vunpack.c.l.b16 %v103
    %v364 = vunpack.c.l.b16 %v104
    %v365 = vunpack.c.l.b16 %v105
    %v366 = vunpack.c.l.b16 %v106
    %v367 = vunpack.c.l.b16 %v107
    %v368 = vunpack.c.l.b16 %v108
    %v369 = vunpack.c.l.b16 %v109
    %v370 = vunpack.c.l.b16 %v110
    %v371 = vunpack.c.l.b16 %v111
    %v372 = vunpack.c.l.b16 %v112
    %v373 = vunpack.c.l.b16 %v113
    %v374 = vunpack.c.l.b16 %v114
    %v375 = vunpack.c.l.b16 %v115
    %v376 = vunpack.c.l.b16 %v116
    %v377 = vunpack.c.l.b16 %v117
    %v378 = vunpack.c.l.b16 %v118
    %v379 = vunpack.c.l.b16 %v119
    %v380 = vunpack.c.l.b16 %v120
    %v381 = vunpack.c.l.b16 %v121
    %v382 = vunpack.c.l.b16 %v122
    %v383 = vunpack.c.l.b16 %v123
    %v384 = vunpack.c.l.b16 %v124
    %v385 = vunpack.c.l.b16 %v125
    %v386 = vunpack.c.l.b16 %v126
    %v387 = vunpack.c.l.b16 %v127
    %v388 = vunpack.c.l.b16 %v128
    %v389 = vunpack.c.l.b16 %v129
    %v390 = vunpack.c.l.b16 %v130
    %v391 = vunpack.c.l.b16 %v131
    %v392 = vunpack.c.l.b16 %v132
    %v393 = vunpack.c.l.b16 %v133
    %v394 = vunpack.c.l.b16 %v134
    %v395 = vunpack.c.l.b16 %v135
    %v396 = vunpack.c.l.b16 %v136
    %v397 = vunpack.c.l.b16 %v137
    %v398 = vunpack.c.l.b16 %v138
    %v399 = vunpack.c.l.b16 %v139
    %v400 = vunpack.c.l.b16 %v140
    %v401 = vunpack.c.l.b16 %v141
    %v402 = vunpack.c.l.b16 %v142
    %v403 = vunpack.c.l.b16 %v143
    %v404 = vunpack.c.l.b16 %v144
    %v405 = vunpack.c.l.b16 %v145
    %v406 = vunpack.c.l.b16 %v146
    %v407 = vunpack.c.l.b16 %v147
    %v408 = vunpack.c.l.b16 %v148
    %v409 = vunpack.c.l.b16 %v149
    %v410 = vunpack.c.l.b16 %v150
    %v411 = vunpack.c.l.b16 %v151
    %v412 = vunpack.c.l.b16 %v152
    %v413 = vunpack.c.l.b16 %v153
    %v414 = vunpack.c.l.b16 %v154
    %v415 = vunpack.c.l.b16 %v155
    %v416 = vunpack.c.l.b16 %v156
    %v417 = vunpack.c.l.b16 %v157
    %v418 = vunpack.c.l.b16 %v158
    %v419 = vunpack.c.l.b16 %v159
    %v420 = vunpack.c.l.b16 %v160
    %v421 = vunpack.c.l.b16 %v161
    %v422 = vunpack.c.l.b16 %v162
    %v423 = vunpack.c.l.b16 %v163
    %v424 = vunpack.c.l.b16 %v164
    %v425 = vunpack.c.l.b16 %v165
    %v426 = vunpack.c.l.b16 %v166
    %v427 = vunpack.c.l.b16 %v167
    %v428 = vunpack.c.l.b16 %v168
    %v429 = vunpack.c.l.b16 %v169
    %v430 = vunpack.c.l.b16 %v170
    %v431 = vunpack.c.l.b16 %v171
    %v432 = vunpack.c.l.b16 %v172
    %v433 = vunpack.c.l.b16 %v173
    %v434 = vunpack.c.l.b16 %v174
    %v435 = vunpack.c.l.b16 %v175
    %v436 = vunpack.c.l.b16 %v176
    %v437 = vunpack.c.l.b16 %v177
    %v438 = vunpack.c.l.b16 %v178
    %v439 = vunpack.c.l.b16 %v179
    %v440 = vunpack.c.l.b16 %v180
    %v441 = vunpack.c.l.b16 %v181
    %v442 = vunpack.c.l.b16 %v182
    %v443 = vunpack.c.l.b16 %v183
    %v444 = vunpack.c.l.b16 %v184
    %v445 = vunpack.c.l.b16 %v185
    %v446 = vunpack.c.l.b16 %v186
    %v447 = vunpack.c.l.b16 %v187
    %v448 = vunpack.c.l.b16 %v188
    %v449 = vunpack.c.l.b16 %v189
    %v450 = vunpack.c.l.b16 %v190
    %v451 = vunpack.c.l.b16 %v191
    %v452 = vunpack.c.l.b16 %v192
    %v453 = vunpack.c.l.b16 %v193
    %v454 = vunpack.c.l.b16 %v194
    %v455 = vunpack.c.l.b16 %v195
    %v456 = vunpack.c.l.b16 %v196
    %v457 = vunpack.c.l.b16 %v197
    %v458 = vunpack.c.l.b16 %v198
    %v459 = vunpack.c.l.b16 %v199
    %v460 = vunpack.c.l.b16 %v200
    %v461 = vunpack.c.l.b16 %v201
    %v462 = vunpack.c.l.b16 %v202
    %v463 = vunpack.c.l.b16 %v203
    %v464 = vunpack.c.l.b16 %v204
    %v465 = vunpack.c.l.b16 %v205
    %v466 = vunpack.c.l.b16 %v206
    %v467 = vunpack.c.l.b16 %v207
    %v468 = vunpack.c.l.b16 %v208
    %v469 = vunpack.c.l.b16 %v209
    %v470 = vunpack.c.l.b16 %v210
    %v471 = vunpack.c.l.b16 %v211
    %v472 = vunpack.c.l.b16 %v212
    %v473 = vunpack.c.l.b16 %v213
    %v474 = vunpack.c.l.b16 %v214
    %v475 = vunpack.c.l.b16 %v215
    %v476 = vunpack.c.l.b16 %v216
    %v477 = vunpack.c.l.b16 %v217
    %v478 = vunpack.c.l.b16 %v218
    %v479 = vunpack.c.l.b16 %v219
    %v480 = vunpack.c.l.b16 %v220
    %v481 = vunpack.c.l.b16 %v221
    %v482 = vunpack.c.l.b16 %v222
    %v483 = vunpack.c.l.b16 %v223
    %v484 = vunpack.c.l.b16 %v224
    %v485 = vunpack.c.l.b16 %v225
    %v486 = vunpack.c.l.b16 %v226
    %v487 = vunpack.c.l.b16 %v227
    %v488 = vpack.c.b16 %v361, %v360
    %v489 = vpack.c.b16 %v363, %v362
    %v490 = vpack.c.b16 %v365, %v364
    %v491 = vpack.c.b16 %v367, %v366
    %v492 = vpack.c.b16 %v369, %v368
    %v493 = vpack.c.b16 %v371, %v370
    %v494 = vpack.c.b16 %v373, %v372
    %v495 = vpack.c.b16 %v375, %v374
    %v496 = vpack.c.b16 %v377, %v376
    %v497 = vpack.c.b16 %v379, %v378
    %v498 = vpack.c.b16 %v381, %v380
    %v499 = vpack.c.b16 %v383, %v382
    %v500 = vpack.c.b16 %v385, %v384
    %v501 = vpack.c.b16 %v387, %v386
    %v502 = vpack.c.b16 %v389, %v388
    %v503 = vpack.c.b16 %v391, %v390
    %v504 = vpack.c.b16 %v393, %v392
    %v505 = vpack.c.b16 %v395, %v394
    %v506 = vpack.c.b16 %v397, %v396
    %v507 = vpack.c.b16 %v399, %v398
    %v508 = vpack.c.b16 %v401, %v400
    %v509 = vpack.c.b16 %v403, %v402
    %v510 = vpack.c.b16 %v405, %v404
    %v511 = vpack.c.b16 %v407, %v406
    %v512 = vpack.c.b16 %v409, %v408
    %v513 = vpack.c.b16 %v411, %v410
    %v514 = vpack.c.b16 %v413, %v412
    %v515 = vpack.c.b16 %v415, %v414
    %v516 = vpack.c.b16 %v417, %v416
    %v517 = vpack.c.b16 %v419, %v418
    %v518 = vpack.c.b16 %v421, %v420
    %v519 = vpack.c.b16 %v423, %v422
    %v520 = vpack.c.b16 %v425, %v424
    %v521 = vpack.c.b16 %v427, %v426
    %v522 = vpack.c.b16 %v429, %v428
    %v523 = vpack.c.b16 %v431, %v430
    %v524 = vpack.c.b16 %v433, %v432
    %v525 = vpack.c.b16 %v435, %v434
    %v526 = vpack.c.b16 %v437, %v436
    %v527 = vpack.c.b16 %v439, %v438
    %v528 = vpack.c.b16 %v441, %v440
    %v529 = vpack.c.b16 %v443, %v442
    %v530 = vpack.c.b16 %v445, %v444
    %v531 = vpack.c.b16 %v447, %v446
    %v532 = vpack.c.b16 %v449, %v448
    %v533 = vpack.c.b16 %v451, %v450
    %v534 = vpack.c.b16 %v453, %v452
    %v535 = vpack.c.b16 %v455, %v454
    %v536 = vpack.c.b16 %v457, %v456
    %v537 = vpack.c.b16 %v459, %v458
    %v538 = vpack.c.b16 %v461, %v460
    %v539 = vpack.c.b16 %v463, %v462
    %v540 = vpack.c.b16 %v465, %v464
    %v541 = vpack.c.b16 %v467, %v466
    %v542 = vpack.c.b16 %v469, %v468
    %v543 = vpack.c.b16 %v471, %v470
    %v544 = vpack.c.b16 %v473, %v472
    %v545 = vpack.c.b16 %v475, %v474
    %v546 = vpack.c.b16 %v477, %v476
    %v547 = vpack.c.b16 %v479, %v478
    %v548 = vpack.c.b16 %v481, %v480
    %v549 = vpack.c.b16 %v483, %v482
    %v550 = vpack.c.b16 %v485, %v484
    %v551 = vpack.c.b16 %v487, %v486
    %616 = vmatpush.bf16.msra.mxu0 %v495
    %617 = vmatpush.bf16.msra.mxu0 %v494
    %618 = vmatpush.bf16.msra.mxu0 %v493
    %619 = vmatpush.bf16.msra.mxu0 %v492
    %620 = vmatpush.bf16.msra.mxu0 %v491
    %621 = vmatpush.bf16.msra.mxu0 %v490
    %622 = vmatpush.bf16.msra.mxu0 %v489
    %623 = vmatpush.bf16.msra.mxu0 %v488
    %624 = vmatmul.bf16.gmra.mxu0 %v92
    %v625 = vpop.f32.mrf.mxu0
    %v626 = vadd.f32 %v230, %v625
    %v627 = vpop.f32.mrf.mxu0
    %628 = vdwg.mxu0
    %629 = vmatpush.bf16.msra.mxu0 %v503
    %630 = vmatpush.bf16.msra.mxu0 %v502
    %631 = vmatpush.bf16.msra.mxu0 %v501
    %632 = vmatpush.bf16.msra.mxu0 %v500
    %633 = vmatpush.bf16.msra.mxu0 %v499
    %634 = vmatpush.bf16.msra.mxu0 %v498
    %635 = vmatpush.bf16.msra.mxu0 %v497
    %636 = vmatpush.bf16.msra.mxu0 %v496
    %637 = vmatmul.bf16.gmra.mxu0 %v93
    %v638 = vpop.f32.mrf.mxu0
    %v639 = vadd.f32 %v626, %v638
    %v640 = vpop.f32.mrf.mxu0
    %641 = vdwg.mxu0
    %642 = vmatpush.bf16.msra.mxu0 %v511
    %643 = vmatpush.bf16.msra.mxu0 %v510
    %644 = vmatpush.bf16.msra.mxu0 %v509
    %645 = vmatpush.bf16.msra.mxu0 %v508
    %646 = vmatpush.bf16.msra.mxu0 %v507
    %647 = vmatpush.bf16.msra.mxu0 %v506
    %648 = vmatpush.bf16.msra.mxu0 %v505
    %649 = vmatpush.bf16.msra.mxu0 %v504
    %650 = vmatmul.bf16.gmra.mxu0 %v94
    %v651 = vpop.f32.mrf.mxu0
    %v652 = vadd.f32 %v639, %v651
    %v653 = vpop.f32.mrf.mxu0
    %654 = vdwg.mxu0
    %655 = vmatpush.bf16.msra.mxu0 %v519
    %656 = vmatpush.bf16.msra.mxu0 %v518
    %657 = vmatpush.bf16.msra.mxu0 %v517
    %658 = vmatpush.bf16.msra.mxu0 %v516
    %659 = vmatpush.bf16.msra.mxu0 %v515
    %660 = vmatpush.bf16.msra.mxu0 %v514
    %661 = vmatpush.bf16.msra.mxu0 %v513
    %662 = vmatpush.bf16.msra.mxu0 %v512
    %663 = vmatmul.bf16.gmra.mxu0 %v95
    %v664 = vpop.f32.mrf.mxu0
    %v665 = vadd.f32 %v652, %v664
    %v666 = vpop.f32.mrf.mxu0
    %667 = vdwg.mxu0
    %668 = vmatpush.bf16.msra.mxu0 %v527
    %669 = vmatpush.bf16.msra.mxu0 %v526
    %670 = vmatpush.bf16.msra.mxu0 %v525
    %671 = vmatpush.bf16.msra.mxu0 %v524
    %672 = vmatpush.bf16.msra.mxu0 %v523
    %673 = vmatpush.bf16.msra.mxu0 %v522
    %674 = vmatpush.bf16.msra.mxu0 %v521
    %675 = vmatpush.bf16.msra.mxu0 %v520
    %676 = vmatmul.bf16.gmra.mxu0 %v96
    %v677 = vpop.f32.mrf.mxu0
    %v678 = vadd.f32 %v665, %v677
    %v679 = vpop.f32.mrf.mxu0
    %680 = vdwg.mxu0
    %681 = vmatpush.bf16.msra.mxu0 %v535
    %682 = vmatpush.bf16.msra.mxu0 %v534
    %683 = vmatpush.bf16.msra.mxu0 %v533
    %684 = vmatpush.bf16.msra.mxu0 %v532
    %685 = vmatpush.bf16.msra.mxu0 %v531
    %686 = vmatpush.bf16.msra.mxu0 %v530
    %687 = vmatpush.bf16.msra.mxu0 %v529
    %688 = vmatpush.bf16.msra.mxu0 %v528
    %689 = vmatmul.bf16.gmra.mxu0 %v97
    %v690 = vpop.f32.mrf.mxu0
    %v691 = vadd.f32 %v678, %v690
    %v692 = vpop.f32.mrf.mxu0
    %693 = vdwg.mxu0
    %694 = vmatpush.bf16.msra.mxu0 %v543
    %695 = vmatpush.bf16.msra.mxu0 %v542
    %696 = vmatpush.bf16.msra.mxu0 %v541
    %697 = vmatpush.bf16.msra.mxu0 %v540
    %698 = vmatpush.bf16.msra.mxu0 %v539
    %699 = vmatpush.bf16.msra.mxu0 %v538
    %700 = vmatpush.bf16.msra.mxu0 %v537
    %701 = vmatpush.bf16.msra.mxu0 %v536
    %702 = vmatmul.bf16.gmra.mxu0 %v98
    %v703 = vpop.f32.mrf.mxu0
    %v704 = vadd.f32 %v691, %v703
    %v705 = vpop.f32.mrf.mxu0
    %706 = vdwg.mxu0
    %707 = vmatpush.bf16.msra.mxu0 %v551
    %708 = vmatpush.bf16.msra.mxu0 %v550
    %709 = vmatpush.bf16.msra.mxu0 %v549
    %710 = vmatpush.bf16.msra.mxu0 %v548
    %711 = vmatpush.bf16.msra.mxu0 %v547
    %712 = vmatpush.bf16.msra.mxu0 %v546
    %713 = vmatpush.bf16.msra.mxu0 %v545
    %714 = vmatpush.bf16.msra.mxu0 %v544
    %715 = vmatmul.bf16.gmra.mxu0 %v99
    %v716 = vpop.f32.mrf.mxu0
    %v717 = vadd.f32 %v704, %v716
    %v718 = vpop.f32.mrf.mxu0
    %719 = vdwg.mxu0
    %v720 = vmax.f32 %v717, 0.0
    %v721 = vpack.c.bf16 %v720, %v720
    %722 = vst [vmem:[#allocation9] sm:$0x1] %v721
    %v723 = vld [vmem:[#allocation7] sm:$0xf]
    %v724 = vld [vmem:[#allocation7 + $0x4] sm:$0xf]
    %v725 = vld [vmem:[#allocation7 + $0x8] sm:$0xf]
    %v726 = vld [vmem:[#allocation7 + $0xc] sm:$0xf]
    %v727 = vld [vmem:[#allocation7 + $0x10] sm:$0xf]
    %v728 = vld [vmem:[#allocation7 + $0x14] sm:$0xf]
    %v729 = vld [vmem:[#allocation7 + $0x18] sm:$0xf]
    %v730 = vld [vmem:[#allocation7 + $0x1c] sm:$0xf]
    %v731 = vld [vmem:[#allocation7 + $0x20] sm:$0xf]
    %v732 = vld [vmem:[#allocation7 + $0x24] sm:$0xf]
    %v733 = vld [vmem:[#allocation7 + $0x28] sm:$0xf]
    %v734 = vld [vmem:[#allocation7 + $0x2c] sm:$0xf]
    %v735 = vld [vmem:[#allocation7 + $0x30] sm:$0xf]
    %v736 = vld [vmem:[#allocation7 + $0x34] sm:$0xf]
    %v737 = vld [vmem:[#allocation7 + $0x38] sm:$0xf]
    %v738 = vld [vmem:[#allocation7 + $0x3c] sm:$0xf]
    %v739 = vld [vmem:[%s4] sm:$0x1]
    %v741 = vperm.slane %v739, 0
    %v759 = vunpack.c.l.b16 %v723
    %v760 = vunpack.c.l.b16 %v724
    %v761 = vunpack.c.l.b16 %v725
    %v762 = vunpack.c.l.b16 %v726
    %v763 = vunpack.c.l.b16 %v727
    %v764 = vunpack.c.l.b16 %v728
    %v765 = vunpack.c.l.b16 %v729
    %v766 = vunpack.c.l.b16 %v730
    %v767 = vunpack.c.l.b16 %v731
    %v768 = vunpack.c.l.b16 %v732
    %v769 = vunpack.c.l.b16 %v733
    %v770 = vunpack.c.l.b16 %v734
    %v771 = vunpack.c.l.b16 %v735
    %v772 = vunpack.c.l.b16 %v736
    %v773 = vunpack.c.l.b16 %v737
    %v774 = vunpack.c.l.b16 %v738
    %v775 = vpack.c.b16 %v760, %v759
    %v776 = vpack.c.b16 %v762, %v761
    %v777 = vpack.c.b16 %v764, %v763
    %v778 = vpack.c.b16 %v766, %v765
    %v779 = vpack.c.b16 %v768, %v767
    %v780 = vpack.c.b16 %v770, %v769
    %v781 = vpack.c.b16 %v772, %v771
    %v782 = vpack.c.b16 %v774, %v773
    %791 = vmatpush.bf16.msra.mxu0 %v782
    %792 = vmatpush.bf16.msra.mxu0 %v781
    %793 = vmatpush.bf16.msra.mxu0 %v780
    %794 = vmatpush.bf16.msra.mxu0 %v779
    %795 = vmatpush.bf16.msra.mxu0 %v778
    %796 = vmatpush.bf16.msra.mxu0 %v777
    %797 = vmatpush.bf16.msra.mxu0 %v776
    %798 = vmatpush.bf16.msra.mxu0 %v775
    %799 = vmatmul.bf16.gmra.mxu0 %v721
    %v800 = vpop.f32.mrf.mxu0
    %v801 = vadd.f32 %v741, %v800
    %v802 = vpop.f32.mrf.mxu0
    %803 = vdwg.mxu0
    %804 = vst [vmem:[#allocation8] sm:$0x3] %v801
    // Predicated region
    $region34: #{tpu_custom_call.1} parent=1 // pred_check
      _
    $region35: #{tpu_custom_call.1} parent=1 // pred_check_branch
      %806 = sbr.rel (0) target = $region37
    $region36: #{tpu_custom_call.1} parent=1 // pred_region
      %808 = vsyncadd [#allocation4], 0
      %s810 = sshll.u32 [#allocation8], 4
      %s811 = int_to_ptr.vmem [resolvable:$true] %s810
      %s812 = sshll.u32 %s5, 4
      %s813 = int_to_ptr.hbm [resolvable:$true] %s812
      %815 = dma.vmem_to_hbm [thread:$0]  %s811, 32, %s813, [#allocation4]
    $region37: #{tpu_custom_call.1} parent=1 // pred_fallthru
      _
    // Predicated region
    $region38: #{tpu_custom_call.1} parent=1 // pred_check
      _
    $region39: #{tpu_custom_call.1} parent=1 // pred_check_branch
      %817 = sbr.rel (0) target = $region41
    $region40: #{tpu_custom_call.1} parent=1 // pred_region
      %819 = vsyncadd [#allocation10], 0
      %s821 = sshll.u32 [#allocation9], 4
      %s822 = int_to_ptr.vmem [resolvable:$true] %s821
      %s823 = sshll.u32 %s6, 4
      %s824 = int_to_ptr.hbm [resolvable:$true] %s823
      %826 = dma.vmem_to_hbm [thread:$0]  %s822, 16, %s824, [#allocation10]
    $region41: #{tpu_custom_call.1} parent=1 // pred_fallthru
      _
    // Predicated region
    $region42: #{tpu_custom_call.1} parent=1 // pred_check
      _
    $region43: #{tpu_custom_call.1} parent=1 // pred_check_branch
      %828 = sbr.rel (0) target = $region45
    $region44: #{tpu_custom_call.1} parent=1 // pred_region
      %830 = dma.done [#allocation4], 32
    $region45: #{tpu_custom_call.1} parent=1 // pred_fallthru
      _
    // Predicated region
    $region46: #{tpu_custom_call.1} parent=1 // pred_check
      _
    $region47: #{tpu_custom_call.1} parent=1 // pred_check_branch
      %832 = sbr.rel (0) target = $region49
    $region48: #{tpu_custom_call.1} parent=1 // pred_region
      %834 = dma.done [#allocation10], 16
    $region49: #{tpu_custom_call.1} parent=1 // pred_fallthru
      _
    %835 = vsyncpa [#allocation3], 1
    %836 = vsyncpa [#allocation6], 1
    %837 = vsyncpa [#allocation4], 1
    %838 = vsyncpa [#allocation10], 1

</llo_original>
